<compile_context>
chip_gen: v5e
topology: v5e:2x2
jax: 0.10.0
libtpu: 0.0.40
codegen_flags: <defaults>
</compile_context>

<pallas_src>
import jax
import jax.numpy as jnp
from jax.experimental import pallas as pl
from jax.experimental.pallas import tpu as pltpu


def _round_up(n, m):
    return ((n + m - 1) // m) * m


def critic_fc_kernel(x_ref, w1_ref, b1_ref, w2_ref, b2_ref, out_ref):
    # Layer 1 (MXU, bf16 operands, f32 accumulation): (TB, D) @ (D, H).
    xb = x_ref[...].astype(jnp.bfloat16)          # cheap VPU cast, VALU has slack
    h = jnp.dot(xb, w1_ref[...], preferred_element_type=jnp.float32)
    h = jnp.maximum(h + b1_ref[...], 0.0)          # bias + ReLU on VPU (f32)
    # Layer 2 (H -> 1) as (1, H) . (TB, H)^T -> (1, TB): produces the result as a
    # lane-dense row directly (unmasked stores, dense writeback DMA).
    v = jax.lax.dot_general(
        w2_ref[...], h,
        dimension_numbers=(((1,), (1,)), ((), ())),
        preferred_element_type=jnp.float32)        # (1, TB)
    out_ref[...] = (v + b2_ref[0]).astype(out_ref.dtype)


def critic_fc_forward(x, w1, b1, w2_row, b2, *, block_batch=4096):
    """CriticFC forward.

    x:      (B, D) float32 (or bfloat16)
    w1:     (D, 256)  (pre-transposed vs PyTorch's (256, D))
    b1:     (1, 256)  float32
    w2_row: (1, 256)  float32 (PyTorch affine2.weight, shape (1, 256), used as a row)
    b2:     (1,)      float32
    Returns value per row, matching PyTorch `.squeeze()`:
      shape (B,) for B > 1, scalar for B == 1.
    """
    B, D = x.shape
    H = w1.shape[1]
    assert w1.shape == (D, H)
    assert b1.shape == (1, H)
    assert w2_row.shape == (1, H)
    assert b2.shape == (1,)

    # MXU operands in bf16 (one-time tiny cast; w1 stays VMEM-resident).
    w1 = w1.astype(jnp.bfloat16)
    b1 = b1.astype(jnp.float32)
    w2_row = w2_row.astype(jnp.float32)
    b2 = b2.astype(jnp.float32)

    # Batch tile: multiple of 128 (lane-dense output rows), capped by block_batch,
    # and clamped to ceil(B/2) so v7x's two TensorCores both get tiles when B is
    # large enough (harmless on single-TC v5e/v6e).
    half = _round_up(max(-(-B // 2), 1), 128)
    TB = min(_round_up(block_batch, 128), half)
    num_tiles = -(-B // TB)
    Bp = num_tiles * TB  # output is padded (tiny); x is NOT padded (partial block)

    out = pl.pallas_call(
        critic_fc_kernel,
        out_shape=jax.ShapeDtypeStruct((1, Bp), jnp.float32),
        grid=(num_tiles,),
        in_specs=[
            pl.BlockSpec((TB, D), lambda i: (i, 0)),            # x: tiled over batch
            pl.BlockSpec((D, H), lambda i: (0, 0)),             # w1 (bf16): VMEM-resident
            pl.BlockSpec((1, H), lambda i: (0, 0)),             # b1: VMEM-resident
            pl.BlockSpec((1, H), lambda i: (0, 0)),             # w2 row: VMEM-resident
            pl.BlockSpec(memory_space=pltpu.MemorySpace.SMEM),  # b2 scalar in SMEM
        ],
        out_specs=pl.BlockSpec((1, TB), lambda i: (0, i)),       # lane-dense row tile
        compiler_params=pltpu.CompilerParams(
            # Batch tiles are independent -> let v7x's 2 TensorCores split them.
            dimension_semantics=("parallel",),
            # Headroom for TB up to 4096 on v5e (default scoped VMEM is 16 MiB there).
            vmem_limit_bytes=32 * 1024 * 1024,
        ),
    )(x, w1, b1, w2_row, b2)

    # Drop padded columns; PyTorch .squeeze(): (B,) for B > 1, scalar for B == 1.
    return jnp.squeeze(out[0, :B])


def init_params(key, input_dim, hidden=256):
    """Deterministic init mimicking nn.Linear's U(-1/sqrt(fan_in), 1/sqrt(fan_in))."""
    k1, k2, k3, k4 = jax.random.split(key, 4)
    bound1 = 1.0 / jnp.sqrt(jnp.float32(input_dim))
    bound2 = 1.0 / jnp.sqrt(jnp.float32(hidden))
    w1 = jax.random.uniform(k1, (input_dim, hidden), jnp.float32, -bound1, bound1)
    b1 = jax.random.uniform(k2, (1, hidden), jnp.float32, -bound1, bound1)
    w2_row = jax.random.uniform(k3, (1, hidden), jnp.float32, -bound2, bound2)
    b2 = jax.random.uniform(k4, (1,), jnp.float32, -bound2, bound2)
    return w1, b1, w2_row, b2


if __name__ == "__main__":
    key = jax.random.PRNGKey(0)
    kx, kp, kx2 = jax.random.split(key, 3)

    input_dim = 120  # state dim per the module docstring
    w1, b1, w2_row, b2 = init_params(kp, input_dim)

    # Small batch (single tile).
    batch = 8
    x = jax.random.normal(kx, (batch, input_dim), jnp.float32)
    v = jax.block_until_ready(critic_fc_forward(x, w1, b1, w2_row, b2))
    ref = jnp.squeeze(jnp.maximum(x @ w1 + b1, 0.0) @ w2_row.T + b2)
    assert v.shape == (batch,)
    # Layer-1 runs with bf16 operands (f32 accumulation) -> compare loosely vs f32 ref.
    assert jnp.allclose(v, ref, atol=1e-2, rtol=1e-2), float(jnp.max(jnp.abs(v - ref)))

    # Multi-tile + ragged tail (exercises batch tiling, pipelining and the
    # partial trailing block without a padded copy of x).
    batch2 = 300
    x2 = jax.random.normal(kx2, (batch2, input_dim), jnp.float32)
    v2 = jax.block_until_ready(
        critic_fc_forward(x2, w1, b1, w2_row, b2, block_batch=128))
    ref2 = jnp.squeeze(jnp.maximum(x2 @ w1 + b1, 0.0) @ w2_row.T + b2)
    assert v2.shape == (batch2,)
    assert jnp.allclose(v2, ref2, atol=1e-2, rtol=1e-2), float(jnp.max(jnp.abs(v2 - ref2)))

    print("KERNEL_OK")
</pallas_src>

<mosaic_0001>
module attributes {stable_mosaic.version = 11 : i64} {
  func.func @critic_fc_kernel(%arg0: i32, %arg1: memref<128x120xf32, #tpu.memory_space<vmem>>, %arg2: memref<120x256xbf16, #tpu.memory_space<vmem>>, %arg3: memref<1x256xf32, #tpu.memory_space<vmem>>, %arg4: memref<1x256xf32, #tpu.memory_space<vmem>>, %arg5: memref<1xf32, #tpu.memory_space<smem>>, %arg6: memref<1x128xf32, #tpu.memory_space<vmem>>) attributes {dimension_semantics = [#tpu.dimension_semantics<parallel>], iteration_bounds = array<i64: 1>, scalar_prefetch = 0 : i64, scratch_operands = 0 : i64, tpu.core_type = #tpu.core_type<tc>, window_params = [{transform_indices = @transform_0, window_bounds = array<i64: 128, 120>}, {pipeline_mode = #tpu.pipeline_mode<synchronous>, transform_indices = @transform_1, window_bounds = array<i64: 120, 256>}, {pipeline_mode = #tpu.pipeline_mode<synchronous>, transform_indices = @transform_2, window_bounds = array<i64: 1, 256>}, {pipeline_mode = #tpu.pipeline_mode<synchronous>, transform_indices = @transform_3, window_bounds = array<i64: 1, 256>}, {transform_indices = @transform_4, window_bounds = array<i64: 1>}, {transform_indices = @transform_5, window_bounds = array<i64: 1, 128>}]} {
    %c0 = arith.constant 0 : index
    %c0_0 = arith.constant 0 : index
    %0 = vector.load %arg1[%c0, %c0_0] : memref<128x120xf32, #tpu.memory_space<vmem>>, vector<128x120xf32>
    %1 = arith.truncf %0 : vector<128x120xf32> to vector<128x120xbf16>
    %c0_1 = arith.constant 0 : index
    %c0_2 = arith.constant 0 : index
    %2 = vector.load %arg2[%c0_1, %c0_2] : memref<120x256xbf16, #tpu.memory_space<vmem>>, vector<120x256xbf16>
    %cst = arith.constant dense<0.000000e+00> : vector<128x256xf32>
    %3 = tpu.matmul %1, %2, %cst {dimension_numbers = #tpu.dot_dimension_numbers<[1], [0], [0], [1], [0, 0, 1, 1], [], []>} : vector<128x120xbf16>, vector<120x256xbf16>, vector<128x256xf32> -> vector<128x256xf32>
    %c0_3 = arith.constant 0 : index
    %c0_4 = arith.constant 0 : index
    %4 = vector.load %arg3[%c0_3, %c0_4] : memref<1x256xf32, #tpu.memory_space<vmem>>, vector<1x256xf32>
    %5 = vector.broadcast %4 : vector<1x256xf32> to vector<128x256xf32>
    %6 = arith.addf %3, %5 : vector<128x256xf32>
    %cst_5 = arith.constant 0.000000e+00 : f32
    %7 = vector.broadcast %cst_5 : f32 to vector<128x256xf32>
    %8 = arith.maximumf %6, %7 : vector<128x256xf32>
    %c0_6 = arith.constant 0 : index
    %c0_7 = arith.constant 0 : index
    %9 = vector.load %arg4[%c0_6, %c0_7] : memref<1x256xf32, #tpu.memory_space<vmem>>, vector<1x256xf32>
    %cst_8 = arith.constant dense<0.000000e+00> : vector<1x128xf32>
    %10 = tpu.matmul %9, %8, %cst_8 {dimension_numbers = #tpu.dot_dimension_numbers<[1], [1], [0], [0], [0, 0, 1, 0], [], []>} : vector<1x256xf32>, vector<128x256xf32>, vector<1x128xf32> -> vector<1x128xf32>
    %c0_9 = arith.constant 0 : index
    %11 = memref.load %arg5[%c0_9] : memref<1xf32, #tpu.memory_space<smem>>
    %12 = vector.broadcast %11 : f32 to vector<1x128xf32>
    %13 = arith.addf %10, %12 : vector<1x128xf32>
    %c0_10 = arith.constant 0 : index
    %c0_11 = arith.constant 0 : index
    %14 = vector.load %arg6[%c0_10, %c0_11] : memref<1x128xf32, #tpu.memory_space<vmem>>, vector<1x128xf32>
    tpu.vector_store %arg6[%c0_10, %c0_11], %13 {strides = array<i32>} : memref<1x128xf32, #tpu.memory_space<vmem>>, vector<1x128xf32>,
    return
  }
  func.func @transform_0(%arg0: i32) -> (i32, i32) {
    %c0_i32 = arith.constant 0 : i32
    %c0_i32_0 = arith.constant 0 : i32
    return %arg0, %c0_i32 : i32, i32
  }
  func.func @transform_1(%arg0: i32) -> (i32, i32) {
    %c0_i32 = arith.constant 0 : i32
    %c0_i32_0 = arith.constant 0 : i32
    %c0_i32_1 = arith.constant 0 : i32
    return %c0_i32, %c0_i32_0 : i32, i32
  }
  func.func @transform_2(%arg0: i32) -> (i32, i32) {
    %c0_i32 = arith.constant 0 : i32
    %c0_i32_0 = arith.constant 0 : i32
    %c0_i32_1 = arith.constant 0 : i32
    return %c0_i32, %c0_i32_0 : i32, i32
  }
  func.func @transform_3(%arg0: i32) -> (i32, i32) {
    %c0_i32 = arith.constant 0 : i32
    %c0_i32_0 = arith.constant 0 : i32
    %c0_i32_1 = arith.constant 0 : i32
    return %c0_i32, %c0_i32_0 : i32, i32
  }
  func.func @transform_4(%arg0: i32) -> i32 {
    %c0_i32 = arith.constant 0 : i32
    %c0_i32_0 = arith.constant 0 : i32
    return %c0_i32 : i32
  }
  func.func @transform_5(%arg0: i32) -> (i32, i32) {
    %c0_i32 = arith.constant 0 : i32
    %c0_i32_0 = arith.constant 0 : i32
    return %c0_i32, %arg0 : i32, i32
  }
}

</mosaic_0001>

<llo_original>
// kernel: tpu_custom_call.1
$region0: #{tpu_custom_call.1}
  #allocation0 [shape = 'u32[]', space=smem, size = 0x4, offset = 0x4, fixed_abs, tag = 'smem constant byte address 0x4 - core index']
  #allocation1 [shape = 'u32[72,128]{1,0:T(1,128)}', space=vmem, size = 0x9000, scoped, tag = 'internal scratch']
  #allocation2 [shape = 'f32[1]{0:T(128)S(6)}', space=smem, size = 0x200, scoped, tag = 'scoped memory for tpu_custom_call.1']
  %s0 = inlined_call_operand.hbm [shape: f32[8,120], index: 0, kind: input, shape index: {}]
  %s1 = inlined_call_operand.hbm [shape: bf16[120,256], index: 1, kind: input, shape index: {}]
  %s2 = inlined_call_operand.vmem [shape: f32[1,256], index: 2, kind: input, shape index: {}]
  %s3 = inlined_call_operand.vmem [shape: f32[1,256], index: 3, kind: input, shape index: {}]
  %s4 = inlined_call_operand.<no memory space> [shape: f32[1], index: 4, kind: input, shape index: {}]
  %s5 = inlined_call_operand.hbm [shape: f32[1,128], index: 5, kind: output, shape index: {}]
  %s6 = sld [smem:[#allocation0]]
  $region38: #{tpu_custom_call.1} parent=0
    _
  %s8 = ssub.s32 1, %s6
  %s9 = scalar_select 0, %s8, %s6
  %10 = sst [smem:[#allocation2]] %s4
  $region1: #{tpu_custom_call.1} parent=0
    #allocation3 [shape = 'u8[65536]{0}', space=vmem, size = 0x10000, scoped, tag = 'input window, operand 0, single buffered']
    #allocation4 [shape = 's32[1]{0}', space=sflag, size = 0x4, scoped, tag = 'scoped memory for tpu_custom_call.1']
    #allocation5 [shape = 's32[1]{0}', space=sflag, size = 0x4, scoped, tag = 'scoped memory for tpu_custom_call.1']
    #allocation6 [shape = 'u8[61440]{0}', space=vmem, size = 0xf000, scoped, tag = 'input window, operand 1, single buffered']
    #allocation7 [shape = 's32[1]{0}', space=sflag, size = 0x4, scoped, tag = 'scoped memory for tpu_custom_call.1']
    #allocation8 [shape = 'u8[512]{0}', space=vmem, size = 0x400, scoped, tag = 'output window, operand 0, single buffered']
    %11 = vsyncpa [#allocation4], 0
    %12 = vsyncpa [#allocation7], 0
    %13 = vsyncpa [#allocation5], 0
    // Predicated region
    $region2: #{tpu_custom_call.1} parent=1 // pred_check
      _
    $region3: #{tpu_custom_call.1} parent=1 // pred_check_branch
      %15 = sbr.rel (0) target = $region5
    $region4: #{tpu_custom_call.1} parent=1 // pred_region
      %17 = vsyncadd [#allocation4], 1920
      %s18 = sshll.u32 %s0, 4
      %s19 = int_to_ptr.hbm [resolvable:$true] %s18
      %s20 = sshll.u32 [#allocation3], 4
      %s21 = int_to_ptr.vmem [resolvable:$true] %s20
      %26 = dma.hbm_to_vmem [thread:$0]  %s19, 128, %s21, [#allocation4], 128, 128, 8
    $region5: #{tpu_custom_call.1} parent=1 // pred_fallthru
      _
    // Predicated region
    $region6: #{tpu_custom_call.1} parent=1 // pred_check
      _
    $region7: #{tpu_custom_call.1} parent=1 // pred_check_branch
      %28 = sbr.rel (0) target = $region9
    $region8: #{tpu_custom_call.1} parent=1 // pred_region
      %30 = vsyncadd [#allocation7], 0
      %s31 = sshll.u32 %s1, 4
      %s32 = int_to_ptr.hbm [resolvable:$true] %s31
      %s33 = sshll.u32 [#allocation6], 4
      %s34 = int_to_ptr.vmem [resolvable:$true] %s33
      %39 = dma.hbm_to_vmem [thread:$0]  %s32, 1920, %s34, [#allocation7], 128, 128, 8
    $region9: #{tpu_custom_call.1} parent=1 // pred_fallthru
      _
    // Predicated region
    $region10: #{tpu_custom_call.1} parent=1 // pred_check
      _
    $region11: #{tpu_custom_call.1} parent=1 // pred_check_branch
      %41 = sbr.rel (0) target = $region13
    $region12: #{tpu_custom_call.1} parent=1 // pred_region
      _
    $region13: #{tpu_custom_call.1} parent=1 // pred_fallthru
      _
    // Predicated region
    $region14: #{tpu_custom_call.1} parent=1 // pred_check
      _
    $region15: #{tpu_custom_call.1} parent=1 // pred_check_branch
      %43 = sbr.rel (0) target = $region17
    $region16: #{tpu_custom_call.1} parent=1 // pred_region
      _
    $region17: #{tpu_custom_call.1} parent=1 // pred_fallthru
      _
    // Predicated region
    $region18: #{tpu_custom_call.1} parent=1 // pred_check
      _
    $region19: #{tpu_custom_call.1} parent=1 // pred_check_branch
      %45 = sbr.rel (0) target = $region21
    $region20: #{tpu_custom_call.1} parent=1 // pred_region
      _
    $region21: #{tpu_custom_call.1} parent=1 // pred_fallthru
      _
    // Predicated region
    $region22: #{tpu_custom_call.1} parent=1 // pred_check
      _
    $region23: #{tpu_custom_call.1} parent=1 // pred_check_branch
      %47 = sbr.rel (0) target = $region25
    $region24: #{tpu_custom_call.1} parent=1 // pred_region
      %49 = dma.done [#allocation4], 2048
    $region25: #{tpu_custom_call.1} parent=1 // pred_fallthru
      _
    // Predicated region
    $region26: #{tpu_custom_call.1} parent=1 // pred_check
      _
    $region27: #{tpu_custom_call.1} parent=1 // pred_check_branch
      %51 = sbr.rel (0) target = $region29
    $region28: #{tpu_custom_call.1} parent=1 // pred_region
      %53 = dma.done [#allocation7], 1920
    $region29: #{tpu_custom_call.1} parent=1 // pred_fallthru
      _
    %v54 = vld [vmem:[#allocation3] sm:$0xff]
    %v55 = vld [vmem:[#allocation3 + $0x8] sm:$0xff]
    %v56 = vld [vmem:[#allocation3 + $0x10] sm:$0xff]
    %v57 = vld [vmem:[#allocation3 + $0x18] sm:$0xff]
    %v58 = vld [vmem:[#allocation3 + $0x20] sm:$0xff]
    %v59 = vld [vmem:[#allocation3 + $0x28] sm:$0xff]
    %v60 = vld [vmem:[#allocation3 + $0x30] sm:$0xff]
    %v61 = vld [vmem:[#allocation3 + $0x38] sm:$0xff]
    %v62 = vld [vmem:[#allocation3 + $0x40] sm:$0xff]
    %v63 = vld [vmem:[#allocation3 + $0x48] sm:$0xff]
    %v64 = vld [vmem:[#allocation3 + $0x50] sm:$0xff]
    %v65 = vld [vmem:[#allocation3 + $0x58] sm:$0xff]
    %v66 = vld [vmem:[#allocation3 + $0x60] sm:$0xff]
    %v67 = vld [vmem:[#allocation3 + $0x68] sm:$0xff]
    %v68 = vld [vmem:[#allocation3 + $0x70] sm:$0xff]
    %v69 = vld [vmem:[#allocation3 + $0x78] sm:$0xff]
    %v70 = vpack.c.bf16 %v55, %v54
    %v71 = vpack.c.bf16 %v57, %v56
    %v72 = vpack.c.bf16 %v59, %v58
    %v73 = vpack.c.bf16 %v61, %v60
    %v74 = vpack.c.bf16 %v63, %v62
    %v75 = vpack.c.bf16 %v65, %v64
    %v76 = vpack.c.bf16 %v67, %v66
    %v77 = vpack.c.bf16 %v69, %v68
    %v78 = vld [vmem:[#allocation6] sm:$0xff]
    %v79 = vld [vmem:[#allocation6 + $0x8] sm:$0xff]
    %v80 = vld [vmem:[#allocation6 + $0x10] sm:$0xff]
    %v81 = vld [vmem:[#allocation6 + $0x18] sm:$0xff]
    %v82 = vld [vmem:[#allocation6 + $0x20] sm:$0xff]
    %v83 = vld [vmem:[#allocation6 + $0x28] sm:$0xff]
    %v84 = vld [vmem:[#allocation6 + $0x30] sm:$0xff]
    %v85 = vld [vmem:[#allocation6 + $0x38] sm:$0xff]
    %v86 = vld [vmem:[#allocation6 + $0x40] sm:$0xff]
    %v87 = vld [vmem:[#allocation6 + $0x48] sm:$0xff]
    %v88 = vld [vmem:[#allocation6 + $0x50] sm:$0xff]
    %v89 = vld [vmem:[#allocation6 + $0x58] sm:$0xff]
    %v90 = vld [vmem:[#allocation6 + $0x60] sm:$0xff]
    %v91 = vld [vmem:[#allocation6 + $0x68] sm:$0xff]
    %v92 = vld [vmem:[#allocation6 + $0x70] sm:$0xff]
    %v93 = vld [vmem:[%s2] sm:$0x3]
    %v95 = vperm.slane %v93, 0
    %v96 = vperm.slane %v93, 1
    %v114 = vunpack.c.l.b16 %v78
    %v115 = vunpack.c.h.b16 %v78
    %v116 = vunpack.c.l.b16 %v79
    %v117 = vunpack.c.h.b16 %v79
    %v118 = vunpack.c.l.b16 %v80
    %v119 = vunpack.c.h.b16 %v80
    %v120 = vunpack.c.l.b16 %v81
    %v121 = vunpack.c.h.b16 %v81
    %v122 = vunpack.c.l.b16 %v82
    %v123 = vunpack.c.h.b16 %v82
    %v124 = vunpack.c.l.b16 %v83
    %v125 = vunpack.c.h.b16 %v83
    %v126 = vunpack.c.l.b16 %v84
    %v127 = vunpack.c.h.b16 %v84
    %v128 = vunpack.c.l.b16 %v85
    %v129 = vunpack.c.h.b16 %v85
    %v130 = vunpack.c.l.b16 %v86
    %v131 = vunpack.c.h.b16 %v86
    %v132 = vunpack.c.l.b16 %v87
    %v133 = vunpack.c.h.b16 %v87
    %v134 = vunpack.c.l.b16 %v88
    %v135 = vunpack.c.h.b16 %v88
    %v136 = vunpack.c.l.b16 %v89
    %v137 = vunpack.c.h.b16 %v89
    %v138 = vunpack.c.l.b16 %v90
    %v139 = vunpack.c.h.b16 %v90
    %v140 = vunpack.c.l.b16 %v91
    %v141 = vunpack.c.h.b16 %v91
    %v142 = vunpack.c.l.b16 %v92
    %v143 = vunpack.c.h.b16 %v92
    %v144 = vpack.c.b16 %v116, %v114
    %v145 = vpack.c.b16 %v117, %v115
    %v146 = vpack.c.b16 %v120, %v118
    %v147 = vpack.c.b16 %v121, %v119
    %v148 = vpack.c.b16 %v124, %v122
    %v149 = vpack.c.b16 %v125, %v123
    %v150 = vpack.c.b16 %v128, %v126
    %v151 = vpack.c.b16 %v129, %v127
    %v152 = vpack.c.b16 %v132, %v130
    %v153 = vpack.c.b16 %v133, %v131
    %v154 = vpack.c.b16 %v136, %v134
    %v155 = vpack.c.b16 %v137, %v135
    %v156 = vpack.c.b16 %v140, %v138
    %v157 = vpack.c.b16 %v141, %v139
    %v158 = vpack.c.b16 %v142, %v142
    %v159 = vpack.c.b16 %v143, %v143
    %vm174 = vcmask 982016
    %v176 = vsel %vm174, %v70, 0
    %v179 = vsel %vm174, %v71, 0
    %v182 = vsel %vm174, %v72, 0
    %v185 = vsel %vm174, %v73, 0
    %v188 = vsel %vm174, %v74, 0
    %v191 = vsel %vm174, %v75, 0
    %v194 = vsel %vm174, %v76, 0
    %v197 = vsel %vm174, %v77, 0
    %vm199 = vcmask 1043456
    %v201 = vsel %vm199, %v158, 0
    %v204 = vsel %vm199, %v159, 0
    %206 = vmatpush.bf16.msra.mxu0 %v201
    %207 = vmatpush.bf16.msra.mxu0 %v156
    %208 = vmatpush.bf16.msra.mxu0 %v154
    %209 = vmatpush.bf16.msra.mxu0 %v152
    %210 = vmatpush.bf16.msra.mxu0 %v150
    %211 = vmatpush.bf16.msra.mxu0 %v148
    %212 = vmatpush.bf16.msra.mxu0 %v146
    %213 = vmatpush.bf16.msra.mxu0 %v144
    %214 = vmatmul.bf16.gmra.mxu0 %v176
    %v215 = vpop.f32.mrf.mxu0
    %v216 = vadd.f32 %v95, %v215
    %v217 = vpop.f32.mrf.mxu0
    %v218 = vadd.f32 %v95, %v217
    %219 = vmatmul.bf16.gmra.mxu0 %v179
    %v220 = vpop.f32.mrf.mxu0
    %v221 = vadd.f32 %v95, %v220
    %v222 = vpop.f32.mrf.mxu0
    %v223 = vadd.f32 %v95, %v222
    %224 = vmatmul.bf16.gmra.mxu0 %v182
    %v225 = vpop.f32.mrf.mxu0
    %v226 = vadd.f32 %v95, %v225
    %v227 = vpop.f32.mrf.mxu0
    %v228 = vadd.f32 %v95, %v227
    %229 = vmatmul.bf16.gmra.mxu0 %v185
    %v230 = vpop.f32.mrf.mxu0
    %v231 = vadd.f32 %v95, %v230
    %v232 = vpop.f32.mrf.mxu0
    %v233 = vadd.f32 %v95, %v232
    %234 = vmatmul.bf16.gmra.mxu0 %v188
    %v235 = vpop.f32.mrf.mxu0
    %v236 = vadd.f32 %v95, %v235
    %v237 = vpop.f32.mrf.mxu0
    %v238 = vadd.f32 %v95, %v237
    %239 = vmatmul.bf16.gmra.mxu0 %v191
    %v240 = vpop.f32.mrf.mxu0
    %v241 = vadd.f32 %v95, %v240
    %v242 = vpop.f32.mrf.mxu0
    %v243 = vadd.f32 %v95, %v242
    %244 = vmatmul.bf16.gmra.mxu0 %v194
    %v245 = vpop.f32.mrf.mxu0
    %v246 = vadd.f32 %v95, %v245
    %v247 = vpop.f32.mrf.mxu0
    %v248 = vadd.f32 %v95, %v247
    %249 = vmatmul.bf16.gmra.mxu0 %v197
    %v250 = vpop.f32.mrf.mxu0
    %v251 = vadd.f32 %v95, %v250
    %v252 = vpop.f32.mrf.mxu0
    %v253 = vadd.f32 %v95, %v252
    %254 = vdwg.mxu0
    %255 = vmatpush.bf16.msra.mxu0 %v204
    %256 = vmatpush.bf16.msra.mxu0 %v157
    %257 = vmatpush.bf16.msra.mxu0 %v155
    %258 = vmatpush.bf16.msra.mxu0 %v153
    %259 = vmatpush.bf16.msra.mxu0 %v151
    %260 = vmatpush.bf16.msra.mxu0 %v149
    %261 = vmatpush.bf16.msra.mxu0 %v147
    %262 = vmatpush.bf16.msra.mxu0 %v145
    %263 = vmatmul.bf16.gmra.mxu0 %v176
    %v264 = vpop.f32.mrf.mxu0
    %v265 = vadd.f32 %v96, %v264
    %v266 = vpop.f32.mrf.mxu0
    %v267 = vadd.f32 %v96, %v266
    %268 = vmatmul.bf16.gmra.mxu0 %v179
    %v269 = vpop.f32.mrf.mxu0
    %v270 = vadd.f32 %v96, %v269
    %v271 = vpop.f32.mrf.mxu0
    %v272 = vadd.f32 %v96, %v271
    %273 = vmatmul.bf16.gmra.mxu0 %v182
    %v274 = vpop.f32.mrf.mxu0
    %v275 = vadd.f32 %v96, %v274
    %v276 = vpop.f32.mrf.mxu0
    %v277 = vadd.f32 %v96, %v276
    %278 = vmatmul.bf16.gmra.mxu0 %v185
    %v279 = vpop.f32.mrf.mxu0
    %v280 = vadd.f32 %v96, %v279
    %v281 = vpop.f32.mrf.mxu0
    %v282 = vadd.f32 %v96, %v281
    %283 = vmatmul.bf16.gmra.mxu0 %v188
    %v284 = vpop.f32.mrf.mxu0
    %v285 = vadd.f32 %v96, %v284
    %v286 = vpop.f32.mrf.mxu0
    %v287 = vadd.f32 %v96, %v286
    %288 = vmatmul.bf16.gmra.mxu0 %v191
    %v289 = vpop.f32.mrf.mxu0
    %v290 = vadd.f32 %v96, %v289
    %v291 = vpop.f32.mrf.mxu0
    %v292 = vadd.f32 %v96, %v291
    %293 = vmatmul.bf16.gmra.mxu0 %v194
    %v294 = vpop.f32.mrf.mxu0
    %v295 = vadd.f32 %v96, %v294
    %v296 = vpop.f32.mrf.mxu0
    %v297 = vadd.f32 %v96, %v296
    %298 = vmatmul.bf16.gmra.mxu0 %v197
    %v299 = vpop.f32.mrf.mxu0
    %v300 = vadd.f32 %v96, %v299
    %v301 = vpop.f32.mrf.mxu0
    %v302 = vadd.f32 %v96, %v301
    %303 = vdwg.mxu0
    %v304 = vmax.f32 %v216, 0.0
    %v305 = vmax.f32 %v265, 0.0
    %v306 = vmax.f32 %v218, 0.0
    %v307 = vmax.f32 %v267, 0.0
    %v308 = vmax.f32 %v221, 0.0
    %v309 = vmax.f32 %v270, 0.0
    %v310 = vmax.f32 %v223, 0.0
    %v311 = vmax.f32 %v272, 0.0
    %v312 = vmax.f32 %v226, 0.0
    %v313 = vmax.f32 %v275, 0.0
    %v314 = vmax.f32 %v228, 0.0
    %v315 = vmax.f32 %v277, 0.0
    %v316 = vmax.f32 %v231, 0.0
    %v317 = vmax.f32 %v280, 0.0
    %v318 = vmax.f32 %v233, 0.0
    %v319 = vmax.f32 %v282, 0.0
    %v320 = vmax.f32 %v236, 0.0
    %v321 = vmax.f32 %v285, 0.0
    %v322 = vmax.f32 %v238, 0.0
    %v323 = vmax.f32 %v287, 0.0
    %v324 = vmax.f32 %v241, 0.0
    %v325 = vmax.f32 %v290, 0.0
    %v326 = vmax.f32 %v243, 0.0
    %v327 = vmax.f32 %v292, 0.0
    %v328 = vmax.f32 %v246, 0.0
    %v329 = vmax.f32 %v295, 0.0
    %v330 = vmax.f32 %v248, 0.0
    %v331 = vmax.f32 %v297, 0.0
    %v332 = vmax.f32 %v251, 0.0
    %v333 = vmax.f32 %v300, 0.0
    %v334 = vmax.f32 %v253, 0.0
    %v335 = vmax.f32 %v302, 0.0
    %v336 = vld [vmem:[%s3] sm:$0x3]
    %s337 = sld [smem:[#allocation2]]
    %v338 = vstv %s337
    %v340 = vperm.slane %v336, 0
    %v341 = vperm.slane %v336, 1
    %344 = vmatpush.xpose.msra.mxu0 %v334
    %345 = vmatpush.xpose.msra.mxu0 %v332
    %346 = vmatpush.xpose.msra.mxu0 %v330
    %347 = vmatpush.xpose.msra.mxu0 %v328
    %348 = vmatpush.xpose.msra.mxu0 %v326
    %349 = vmatpush.xpose.msra.mxu0 %v324
    %350 = vmatpush.xpose.msra.mxu0 %v322
    %351 = vmatpush.xpose.msra.mxu0 %v320
    %352 = vmatpush.xpose.msra.mxu0 %v318
    %353 = vmatpush.xpose.msra.mxu0 %v316
    %354 = vmatpush.xpose.msra.mxu0 %v314
    %355 = vmatpush.xpose.msra.mxu0 %v312
    %356 = vmatpush.xpose.msra.mxu0 %v310
    %357 = vmatpush.xpose.msra.mxu0 %v308
    %358 = vmatpush.xpose.msra.mxu0 %v306
    %359 = vmatpush.xpose.msra.mxu0 %v304
    %360 = vmatmul.f32.gmra.mxu0 %v340
    %v361 = vpop.f32.mrf.mxu0
    %v362 = vadd.f32 %v338, %v361
    %363 = vdwg.mxu0
    %364 = vmatpush.xpose.msra.mxu0 %v335
    %365 = vmatpush.xpose.msra.mxu0 %v333
    %366 = vmatpush.xpose.msra.mxu0 %v331
    %367 = vmatpush.xpose.msra.mxu0 %v329
    %368 = vmatpush.xpose.msra.mxu0 %v327
    %369 = vmatpush.xpose.msra.mxu0 %v325
    %370 = vmatpush.xpose.msra.mxu0 %v323
    %371 = vmatpush.xpose.msra.mxu0 %v321
    %372 = vmatpush.xpose.msra.mxu0 %v319
    %373 = vmatpush.xpose.msra.mxu0 %v317
    %374 = vmatpush.xpose.msra.mxu0 %v315
    %375 = vmatpush.xpose.msra.mxu0 %v313
    %376 = vmatpush.xpose.msra.mxu0 %v311
    %377 = vmatpush.xpose.msra.mxu0 %v309
    %378 = vmatpush.xpose.msra.mxu0 %v307
    %379 = vmatpush.xpose.msra.mxu0 %v305
    %380 = vmatmul.f32.gmra.mxu0 %v341
    %v381 = vpop.f32.mrf.mxu0
    %v382 = vadd.f32 %v362, %v381
    %383 = vdwg.mxu0
    %384 = vst [vmem:[#allocation8] sm:$0x1] %v382
    // Predicated region
    $region30: #{tpu_custom_call.1} parent=1 // pred_check
      _
    $region31: #{tpu_custom_call.1} parent=1 // pred_check_branch
      %386 = sbr.rel (0) target = $region33
    $region32: #{tpu_custom_call.1} parent=1 // pred_region
      %388 = vsyncadd [#allocation5], 0
      %s390 = sshll.u32 [#allocation8], 4
      %s391 = int_to_ptr.vmem [resolvable:$true] %s390
      %s392 = sshll.u32 %s5, 4
      %s393 = int_to_ptr.hbm [resolvable:$true] %s392
      %395 = dma.vmem_to_hbm [thread:$0]  %s391, 16, %s393, [#allocation5]
    $region33: #{tpu_custom_call.1} parent=1 // pred_fallthru
      _
    // Predicated region
    $region34: #{tpu_custom_call.1} parent=1 // pred_check
      _
    $region35: #{tpu_custom_call.1} parent=1 // pred_check_branch
      %397 = sbr.rel (0) target = $region37
    $region36: #{tpu_custom_call.1} parent=1 // pred_region
      %399 = dma.done [#allocation5], 16
    $region37: #{tpu_custom_call.1} parent=1 // pred_fallthru
      _
    %400 = vsyncpa [#allocation4], 1
    %401 = vsyncpa [#allocation7], 1
    %402 = vsyncpa [#allocation5], 1

</llo_original>
